<compile_context>
chip_gen: v5e
topology: v5e:2x2
jax: 0.10.0
libtpu: 0.0.40
codegen_flags: <defaults>
</compile_context>

<pallas_src>
import functools

import jax
import jax.numpy as jnp
from jax.experimental import pallas as pl
from jax.experimental.pallas import tpu as pltpu


def _round_up(x, m):
    return (x + m - 1) // m * m


def _vmem_bytes(tq, n_p, f_out_p, bpe):
    """Rough per-grid-step VMEM footprint (double-buffered DMA windows + f32
    score intermediates)."""
    dma = 2 * (tq * f_out_p * 4           # Wh query rows (f32)
               + n_p * f_out_p * bpe      # Wh keys/values
               + f_out_p * n_p * bpe      # Wh^T
               + tq * f_out_p * 4         # a1 (f32)
               + tq * f_out_p * bpe       # a2
               + tq * n_p * 1             # int8 adjacency mask
               + tq * f_out_p * 4)        # output
    scores = 6 * tq * n_p * 4             # e / att / p live f32 copies (headroom)
    return dma + scores


def _gat_kernel(whq_ref, wh_ref, wht_ref, a1_ref, a2_ref, mask_ref, o_ref, *,
                alpha, beta, approx_recip):
    """One (graph b, query-row-tile r) grid step.

    whq_ref : (TQ, F_out_p)   f32      query rows of Wh (VPU math + beta*Wh)
    wh_ref  : (N_p, F_out_p)  mm_dtype Wh keys/values (PV matmul rhs)
    wht_ref : (F_out_p, N_p)  mm_dtype Wh^T (host-transposed, score matmul rhs)
    a1_ref  : (TQ, F_out_p)   f32      a[:, :F, 0] rows of this tile
    a2_ref  : (TQ, F_out_p)   mm_dtype a[:, F:, 0] rows of this tile
    mask_ref: (TQ, N_p)       int8     adjacency (adj > 0)
    o_ref   : (TQ, F_out_p)   f32
    """
    wh_q = whq_ref[...]                                              # f32

    # e[i, j] = leakyrelu( Wh[i]·a1[i] + Wh[j]·a2[i] )
    s1 = jnp.sum(wh_q * a1_ref[...], axis=-1, keepdims=True)         # (TQ,1)  VPU
    s2 = jnp.dot(a2_ref[...], wht_ref[...],
                 preferred_element_type=jnp.float32)                 # (TQ,N_p) MXU
    e = s1 + s2
    e = jnp.where(e > 0, e, alpha * e)                               # LeakyReLU f32

    # Finite mask: an all-masked row softmaxes to uniform instead of NaN
    # (intentional divergence from the torch -inf behaviour).
    maskf = mask_ref[...].astype(jnp.float32)
    att = jnp.where(maskf > 0.0, e, -1e30)

    # Row softmax over keys; normalisation deferred until after the PV matmul.
    m = jnp.max(att, axis=-1, keepdims=True)
    p = jnp.exp(att - m)                                             # unnormalised
    denom = jnp.sum(p, axis=-1, keepdims=True)

    h_prime = jnp.dot(p.astype(wh_ref.dtype), wh_ref[...],
                      preferred_element_type=jnp.float32)            # (TQ,F_out_p)
    h_prime = h_prime * pl.reciprocal(denom, approx=approx_recip)    # f32 scale

    # out = elu(h' + beta * Wh); clamp the exp argument (hygiene, no behaviour change)
    x = h_prime + beta * wh_q
    o_ref[...] = jnp.where(x > 0, x,
                           jnp.exp(jnp.minimum(x, 0.0)) - 1.0).astype(o_ref.dtype)


def gat_layer_forward(h, adj, w, a, *, alpha=0.2, beta=0.3,
                      mm_dtype=jnp.bfloat16, approx_recip=True, row_tile=None):
    """Batched Pallas GATLayer.forward.

    h   : (B, N, F_in) or (N, F_in)
    adj : (B, N, N)    or (N, N)
    w   : (F_in, F_out)
    a   : (N, 2*F_out, 1)   (num_of_task == N, required by the torch broadcast)
    """
    squeeze = h.ndim == 2
    if squeeze:
        h, adj = h[None], adj[None]
    B, N, _ = h.shape
    f_out = w.shape[1]
    assert a.shape == (N, 2 * f_out, 1), "num_of_task must equal N"

    f32 = jnp.float32
    bpe = jnp.dtype(mm_dtype).itemsize

    # ---- hoisted projection: Wh = h @ W computed ONCE per graph (plain XLA) ---
    if mm_dtype == f32:
        wh = jnp.einsum("bnf,fo->bno", h.astype(f32), w.astype(f32))
    else:
        wh = jnp.einsum("bnf,fo->bno", h.astype(mm_dtype), w.astype(mm_dtype),
                        preferred_element_type=f32)

    # ---- lane-dense padding & row-tile selection -------------------------------
    f_out_p = _round_up(f_out, 128)
    n_p = _round_up(N, 8)
    if row_tile is None:
        if n_p <= 256:
            row_tile = n_p
        else:
            # TQ=256 amortises per-step overhead (v6e/v7x); fall back to 128 if the
            # per-step VMEM window would not fit v7x's 64 MiB budget comfortably.
            row_tile = 256 if _vmem_bytes(256, n_p, f_out_p, bpe) < (40 << 20) else 128
    n_p = _round_up(n_p, row_tile)
    # TODO(synk): for N beyond ~16K nodes add an inner key-tile grid axis with
    # online (flash) softmax so the score row and Wh no longer scale with N in VMEM.

    wh_f32 = jnp.pad(wh.astype(f32), ((0, 0), (0, n_p - N), (0, f_out_p - f_out)))
    wh_mm = wh_f32.astype(mm_dtype)                 # keys / values (MXU operand)
    wh_t = jnp.swapaxes(wh_mm, 1, 2)                # (B, F_out_p, N_p) host transpose

    a1 = jnp.pad(a[:, :f_out, 0].astype(f32),
                 ((0, n_p - N), (0, f_out_p - f_out)))                   # f32 (VPU)
    a2 = jnp.pad(a[:, f_out:, 0].astype(f32),
                 ((0, n_p - N), (0, f_out_p - f_out))).astype(mm_dtype)  # MXU lhs

    # adjacency as int8: 1 byte/elem HBM stream; padded key columns get 0 = masked
    mask = jnp.pad((adj > 0).astype(jnp.int8), ((0, 0), (0, n_p - N), (0, n_p - N)))

    kernel = functools.partial(_gat_kernel, alpha=float(alpha), beta=float(beta),
                               approx_recip=bool(approx_recip))

    grid = (B, n_p // row_tile)
    vmem_limit = int(min(64 << 20,
                         max(32 << 20, 2 * _vmem_bytes(row_tile, n_p, f_out_p, bpe))))
    cost = pl.CostEstimate(
        flops=int(4 * B * n_p * n_p * f_out_p),                   # score + PV matmuls
        transcendentals=int(B * n_p * n_p + B * n_p * f_out_p),   # softmax exp + elu
        bytes_accessed=int(B * n_p * f_out_p * (4 + 2 * bpe + 4)
                           + n_p * f_out_p * (4 + bpe)
                           + B * n_p * n_p))

    out = pl.pallas_call(
        kernel,
        out_shape=jax.ShapeDtypeStruct((B, n_p, f_out_p), jnp.float32),
        grid=grid,
        in_specs=[
            pl.BlockSpec((None, row_tile, f_out_p), lambda b, r: (b, r, 0)),  # Wh query rows (f32)
            pl.BlockSpec((None, n_p, f_out_p), lambda b, r: (b, 0, 0)),       # Wh keys/values
            pl.BlockSpec((None, f_out_p, n_p), lambda b, r: (b, 0, 0)),       # Wh^T
            pl.BlockSpec((row_tile, f_out_p), lambda b, r: (r, 0)),           # a1
            pl.BlockSpec((row_tile, f_out_p), lambda b, r: (r, 0)),           # a2
            pl.BlockSpec((None, row_tile, n_p), lambda b, r: (b, r, 0)),      # adj mask (int8)
        ],
        out_specs=pl.BlockSpec((None, row_tile, f_out_p), lambda b, r: (b, r, 0)),
        compiler_params=pltpu.CompilerParams(
            dimension_semantics=("parallel", "parallel"),
            vmem_limit_bytes=vmem_limit),
        cost_estimate=cost,
    )(wh_f32, wh_mm, wh_t, a1, a2, mask)

    out = out[:, :N, :f_out]
    return out[0] if squeeze else out


# ---------------- reference (mirrors the torch code, plain JAX) ----------------
def gat_layer_reference(h, adj, w, a, *, alpha=0.2, beta=0.3):
    N, _ = h.shape
    f_out = w.shape[1]
    wh = h @ w
    a_input = jnp.concatenate(
        [jnp.tile(wh, (1, N)).reshape(N * N, f_out), jnp.tile(wh, (N, 1))], axis=1
    ).reshape(N, N, 2 * f_out)
    e = jnp.einsum("ijk,ikl->ijl", a_input, a)[..., 0]
    e = jnp.where(e > 0, e, alpha * e)
    att = jnp.where(adj > 0, e, -jnp.inf)   # torch's -9e40 overflows to -inf in f32
    att = jax.nn.softmax(att, axis=1)
    h_prime = att @ wh
    x = h_prime + beta * wh
    return jnp.where(x > 0, x, jnp.exp(x) - 1.0)


def _xavier_uniform(key, shape, fan_in, fan_out, gain):
    bound = gain * (6.0 / (fan_in + fan_out)) ** 0.5
    return jax.random.uniform(key, shape, jnp.float32, -bound, bound)


if __name__ == "__main__":
    # B graphs batched into one pallas_call; N nodes, F_in == F_out (the torch
    # .view in forward only works when input_feature == output_feature).
    B, N, F_IN, F_OUT = 2, 16, 32, 32
    NUM_TASK = N                     # required by the matmul broadcast in forward
    ALPHA, BETA = 0.2, 0.3

    key = jax.random.PRNGKey(0)
    k_h, k_adj, k_w, k_a = jax.random.split(key, 4)

    h = jax.random.normal(k_h, (B, N, F_IN), jnp.float32)
    adj = (jax.random.uniform(k_adj, (B, N, N)) > 0.5).astype(jnp.float32)
    adj = jnp.maximum(adj, jnp.eye(N, dtype=jnp.float32)[None])   # self-loops

    # deterministic xavier_uniform(gain=1.414) init, same shapes as nn.Parameter
    w = _xavier_uniform(k_w, (F_IN, F_OUT), fan_in=F_IN, fan_out=F_OUT, gain=1.414)
    a = _xavier_uniform(k_a, (NUM_TASK, 2 * F_OUT, 1),
                        fan_in=2 * F_OUT, fan_out=NUM_TASK, gain=1.414)

    ref = jnp.stack([gat_layer_reference(h[b], adj[b], w, a, alpha=ALPHA, beta=BETA)
                     for b in range(B)])

    # 1) f32 MXU operands + exact reciprocal.  Tolerance is moderate (not 1e-5)
    #    because the backend's default f32 matmul precision may route both the
    #    kernel and the XLA reference through reduced-precision MXU passes;
    #    structural bugs (wrong axis / mask / index_map) produce O(1) errors.
    out_f32 = gat_layer_forward(h, adj, w, a, alpha=ALPHA, beta=BETA,
                                mm_dtype=jnp.float32, approx_recip=False)
    jax.block_until_ready(out_f32)
    assert out_f32.shape == (B, N, F_OUT)
    assert jnp.allclose(out_f32, ref, atol=5e-2, rtol=5e-2), (
        "f32 path mismatch, max|diff|=" + str(float(jnp.max(jnp.abs(out_f32 - ref)))))

    # 2) perf path: bf16 MXU operands + approx (EUP) reciprocal; loose sanity
    #    tolerance for the reduced-precision numerics.
    out_bf16 = gat_layer_forward(h, adj, w, a, alpha=ALPHA, beta=BETA,
                                 mm_dtype=jnp.bfloat16, approx_recip=True)
    jax.block_until_ready(out_bf16)
    assert out_bf16.shape == (B, N, F_OUT)
    assert jnp.allclose(out_bf16, ref, atol=3e-1, rtol=1e-1), (
        "bf16 path out of tol, max|diff|=" + str(float(jnp.max(jnp.abs(out_bf16 - ref)))))

    print("KERNEL_OK")
</pallas_src>

<mosaic_0001>
module attributes {stable_mosaic.version = 11 : i64} {
  func.func @_gat_kernel(%arg0: i32, %arg1: i32, %arg2: memref<1x16x128xf32, #tpu.memory_space<vmem>>, %arg3: memref<1x16x128xf32, #tpu.memory_space<vmem>>, %arg4: memref<1x128x16xf32, #tpu.memory_space<vmem>>, %arg5: memref<16x128xf32, #tpu.memory_space<vmem>>, %arg6: memref<16x128xf32, #tpu.memory_space<vmem>>, %arg7: memref<1x16x16xi8, #tpu.memory_space<vmem>>, %arg8: memref<1x16x128xf32, #tpu.memory_space<vmem>>) attributes {dimension_semantics = [#tpu.dimension_semantics<parallel>, #tpu.dimension_semantics<parallel>], iteration_bounds = array<i64: 2, 1>, scalar_prefetch = 0 : i64, scratch_operands = 0 : i64, tpu.core_type = #tpu.core_type<tc>, window_params = [{transform_indices = @transform_0, window_bounds = array<i64: 1, 16, 128>}, {transform_indices = @transform_1, window_bounds = array<i64: 1, 16, 128>}, {transform_indices = @transform_2, window_bounds = array<i64: 1, 128, 16>}, {transform_indices = @transform_3, window_bounds = array<i64: 16, 128>}, {transform_indices = @transform_4, window_bounds = array<i64: 16, 128>}, {transform_indices = @transform_5, window_bounds = array<i64: 1, 16, 16>}, {transform_indices = @transform_6, window_bounds = array<i64: 1, 16, 128>}]} {
    %c0 = arith.constant 0 : index
    %c0_0 = arith.constant 0 : index
    %c0_1 = arith.constant 0 : index
    %0 = vector.load %arg2[%c0, %c0_0, %c0_1] : memref<1x16x128xf32, #tpu.memory_space<vmem>>, vector<1x16x128xf32>
    %1 = vector.shape_cast %0 : vector<1x16x128xf32> to vector<16x128xf32>
    %c0_2 = arith.constant 0 : index
    %c0_3 = arith.constant 0 : index
    %2 = vector.load %arg5[%c0_2, %c0_3] : memref<16x128xf32, #tpu.memory_space<vmem>>, vector<16x128xf32>
    %3 = arith.mulf %1, %2 : vector<16x128xf32>
    %cst = arith.constant dense<0.000000e+00> : vector<16xf32>
    %4 = vector.multi_reduction <add>, %3, %cst [1] : vector<16x128xf32> to vector<16xf32>
    %5 = vector.shape_cast %4 : vector<16xf32> to vector<16x1xf32>
    %c0_4 = arith.constant 0 : index
    %c0_5 = arith.constant 0 : index
    %6 = vector.load %arg6[%c0_4, %c0_5] : memref<16x128xf32, #tpu.memory_space<vmem>>, vector<16x128xf32>
    %c0_6 = arith.constant 0 : index
    %c0_7 = arith.constant 0 : index
    %c0_8 = arith.constant 0 : index
    %7 = vector.load %arg4[%c0_6, %c0_7, %c0_8] : memref<1x128x16xf32, #tpu.memory_space<vmem>>, vector<1x128x16xf32>
    %8 = vector.shape_cast %7 : vector<1x128x16xf32> to vector<128x16xf32>
    %cst_9 = arith.constant dense<0.000000e+00> : vector<16x16xf32>
    %9 = tpu.matmul %6, %8, %cst_9 {dimension_numbers = #tpu.dot_dimension_numbers<[1], [0], [0], [1], [0, 0, 1, 1], [], []>} : vector<16x128xf32>, vector<128x16xf32>, vector<16x16xf32> -> vector<16x16xf32>
    %10 = vector.broadcast %5 : vector<16x1xf32> to vector<16x16xf32>
    %11 = arith.addf %10, %9 : vector<16x16xf32>
    %cst_10 = arith.constant 0.000000e+00 : f32
    %12 = vector.broadcast %cst_10 : f32 to vector<16x16xf32>
    %13 = arith.cmpf ogt, %11, %12 : vector<16x16xf32>
    %cst_11 = arith.constant 2.000000e-01 : f32
    %14 = vector.broadcast %cst_11 : f32 to vector<16x16xf32>
    %15 = arith.mulf %14, %11 : vector<16x16xf32>
    %16 = arith.select %13, %11, %15 : vector<16x16xi1>, vector<16x16xf32>
    %c0_12 = arith.constant 0 : index
    %c0_13 = arith.constant 0 : index
    %c0_14 = arith.constant 0 : index
    %17 = vector.load %arg7[%c0_12, %c0_13, %c0_14] : memref<1x16x16xi8, #tpu.memory_space<vmem>>, vector<1x16x16xi8>
    %18 = vector.shape_cast %17 : vector<1x16x16xi8> to vector<16x16xi8>
    %19 = arith.sitofp %18 : vector<16x16xi8> to vector<16x16xf32>
    %cst_15 = arith.constant 0.000000e+00 : f32
    %20 = vector.broadcast %cst_15 : f32 to vector<16x16xf32>
    %21 = arith.cmpf ogt, %19, %20 : vector<16x16xf32>
    %cst_16 = arith.constant -1.000000e+30 : f32
    %22 = vector.broadcast %cst_16 : f32 to vector<16x16xf32>
    %23 = arith.select %21, %16, %22 : vector<16x16xi1>, vector<16x16xf32>
    %cst_17 = arith.constant dense<0xFF800000> : vector<16xf32>
    %24 = vector.multi_reduction <maximumf>, %23, %cst_17 [1] : vector<16x16xf32> to vector<16xf32>
    %25 = vector.shape_cast %24 : vector<16xf32> to vector<16x1xf32>
    %26 = vector.broadcast %25 : vector<16x1xf32> to vector<16x16xf32>
    %27 = arith.subf %23, %26 : vector<16x16xf32>
    %28 = math.exp %27 : vector<16x16xf32>
    %cst_18 = arith.constant dense<0.000000e+00> : vector<16xf32>
    %29 = vector.multi_reduction <add>, %28, %cst_18 [1] : vector<16x16xf32> to vector<16xf32>
    %30 = vector.shape_cast %29 : vector<16xf32> to vector<16x1xf32>
    %c0_19 = arith.constant 0 : index
    %c0_20 = arith.constant 0 : index
    %c0_21 = arith.constant 0 : index
    %31 = vector.load %arg3[%c0_19, %c0_20, %c0_21] : memref<1x16x128xf32, #tpu.memory_space<vmem>>, vector<1x16x128xf32>
    %32 = vector.shape_cast %31 : vector<1x16x128xf32> to vector<16x128xf32>
    %cst_22 = arith.constant dense<0.000000e+00> : vector<16x128xf32>
    %33 = tpu.matmul %28, %32, %cst_22 {dimension_numbers = #tpu.dot_dimension_numbers<[1], [0], [0], [1], [0, 0, 1, 1], [], []>} : vector<16x16xf32>, vector<16x128xf32>, vector<16x128xf32> -> vector<16x128xf32>
    %34 = tpu.reciprocal %30 : vector<16x1xf32> -> vector<16x1xf32>
    %35 = vector.broadcast %34 : vector<16x1xf32> to vector<16x128xf32>
    %36 = arith.mulf %33, %35 : vector<16x128xf32>
    %cst_23 = arith.constant 3.000000e-01 : f32
    %37 = vector.broadcast %cst_23 : f32 to vector<16x128xf32>
    %38 = arith.mulf %37, %1 : vector<16x128xf32>
    %39 = arith.addf %36, %38 : vector<16x128xf32>
    %cst_24 = arith.constant 0.000000e+00 : f32
    %40 = vector.broadcast %cst_24 : f32 to vector<16x128xf32>
    %41 = arith.cmpf ogt, %39, %40 : vector<16x128xf32>
    %cst_25 = arith.constant 0.000000e+00 : f32
    %42 = vector.broadcast %cst_25 : f32 to vector<16x128xf32>
    %43 = arith.minimumf %39, %42 : vector<16x128xf32>
    %44 = math.exp %43 : vector<16x128xf32>
    %cst_26 = arith.constant 1.000000e+00 : f32
    %45 = vector.broadcast %cst_26 : f32 to vector<16x128xf32>
    %46 = arith.subf %44, %45 : vector<16x128xf32>
    %47 = arith.select %41, %39, %46 : vector<16x128xi1>, vector<16x128xf32>
    %c0_27 = arith.constant 0 : index
    %c0_28 = arith.constant 0 : index
    %c0_29 = arith.constant 0 : index
    %48 = vector.load %arg8[%c0_27, %c0_28, %c0_29] : memref<1x16x128xf32, #tpu.memory_space<vmem>>, vector<1x16x128xf32>
    %49 = vector.shape_cast %48 : vector<1x16x128xf32> to vector<16x128xf32>
    %50 = vector.shape_cast %47 : vector<16x128xf32> to vector<1x16x128xf32>
    tpu.vector_store %arg8[%c0_27, %c0_28, %c0_29], %50 {strides = array<i32>} : memref<1x16x128xf32, #tpu.memory_space<vmem>>, vector<1x16x128xf32>,
    return
  }
  func.func @transform_0(%arg0: i32, %arg1: i32) -> (i32, i32, i32) {
    %c0_i32 = arith.constant 0 : i32
    %c0_i32_0 = arith.constant 0 : i32
    return %arg0, %arg1, %c0_i32 : i32, i32, i32
  }
  func.func @transform_1(%arg0: i32, %arg1: i32) -> (i32, i32, i32) {
    %c0_i32 = arith.constant 0 : i32
    %c0_i32_0 = arith.constant 0 : i32
    %c0_i32_1 = arith.constant 0 : i32
    return %arg0, %c0_i32, %c0_i32_0 : i32, i32, i32
  }
  func.func @transform_2(%arg0: i32, %arg1: i32) -> (i32, i32, i32) {
    %c0_i32 = arith.constant 0 : i32
    %c0_i32_0 = arith.constant 0 : i32
    %c0_i32_1 = arith.constant 0 : i32
    return %arg0, %c0_i32, %c0_i32_0 : i32, i32, i32
  }
  func.func @transform_3(%arg0: i32, %arg1: i32) -> (i32, i32) {
    %c0_i32 = arith.constant 0 : i32
    %c0_i32_0 = arith.constant 0 : i32
    return %arg1, %c0_i32 : i32, i32
  }
  func.func @transform_4(%arg0: i32, %arg1: i32) -> (i32, i32) {
    %c0_i32 = arith.constant 0 : i32
    %c0_i32_0 = arith.constant 0 : i32
    return %arg1, %c0_i32 : i32, i32
  }
  func.func @transform_5(%arg0: i32, %arg1: i32) -> (i32, i32, i32) {
    %c0_i32 = arith.constant 0 : i32
    %c0_i32_0 = arith.constant 0 : i32
    return %arg0, %arg1, %c0_i32 : i32, i32, i32
  }
  func.func @transform_6(%arg0: i32, %arg1: i32) -> (i32, i32, i32) {
    %c0_i32 = arith.constant 0 : i32
    %c0_i32_0 = arith.constant 0 : i32
    return %arg0, %arg1, %c0_i32 : i32, i32, i32
  }
}

</mosaic_0001>

<llo_original>
// kernel: tpu_custom_call.1
$region0: #{tpu_custom_call.1}
  #allocation0 [shape = 'u32[]', space=smem, size = 0x4, offset = 0x4, fixed_abs, tag = 'smem constant byte address 0x4 - core index']
  #allocation1 [shape = 'u32[72,128]{1,0:T(1,128)}', space=vmem, size = 0x9000, scoped, tag = 'internal scratch']
  %s0 = inlined_call_operand.vmem [shape: f32[2,16,128], index: 0, kind: input, shape index: {}]
  %s1 = inlined_call_operand.vmem [shape: f32[2,16,128], index: 1, kind: input, shape index: {}]
  %s2 = inlined_call_operand.vmem [shape: f32[2,128,16], index: 2, kind: input, shape index: {}]
  %s3 = inlined_call_operand.vmem [shape: f32[16,128], index: 3, kind: input, shape index: {}]
  %s4 = inlined_call_operand.vmem [shape: f32[16,128], index: 4, kind: input, shape index: {}]
  %s5 = inlined_call_operand.vmem [shape: s8[2,16,16], index: 5, kind: input, shape index: {}]
  %s6 = inlined_call_operand.hbm [shape: f32[2,16,128], index: 6, kind: output, shape index: {}]
  %s7 = sld [smem:[#allocation0]]
  $region57: #{tpu_custom_call.1} parent=0
    _
  %s9 = ssub.s32 1, %s7
  %s10 = scalar_select 0, %s9, %s7
  $region1: #{tpu_custom_call.1} parent=0
    #allocation2 [shape = 'u8[16384]{0}', space=vmem, size = 0x4000, scoped, tag = 'output window, operand 0']
    #allocation3 [shape = 's32[2]{0}', space=sflag, size = 0x8, scoped, tag = 'scoped memory for tpu_custom_call.1']
    %11 = vsyncpa [#allocation3], 0
    %s12 = scalar_lea.sflag [#allocation3], 1
    %13 = vsyncpa %s12, 0
    loop: start=0, step=1, limit=4
    $region2: #{tpu_custom_call.1} parent=1 // loop_pre_header
      _
    $region3: #{tpu_custom_call.1} parent=1 // loop_header
      %s15 = sphi 0, %s19
      %p16 = scmp.ge.s32.totalorder %s15, 4
      %s22 = sphi 0, %s34
      %s23 = sphi 0, %s30
      %s24 = sphi 0, %s22
      %s25 = sphi 0, %s23
      %s26 = sphi 0, %s24
      %s27 = sphi 0, %s25
      %s39 = sphi 0, %s41
      %s42 = sphi 0, %s39
      %s43 = sphi 0, %s42
      %s59 = sphi 0, %s43
      %s65 = sphi 0, %s67
      %s68 = sphi 0, %s65
      %s69 = sphi 0, %s68
      %s85 = sphi 0, %s69
      %s91 = sphi 0, %s93
      %s94 = sphi 0, %s91
      %s95 = sphi 0, %s94
      %s111 = sphi 0, %s95
      %s117 = sphi 0, %s119
      %s120 = sphi 0, %s117
      %s121 = sphi 0, %s120
      %s137 = sphi 0, %s121
      %s143 = sphi 0, %s145
      %s146 = sphi 0, %s143
      %s147 = sphi 0, %s146
      %s163 = sphi 0, %s147
      %s171 = sphi 0, %s173
      %s174 = sphi 0, %s171
      %s175 = sphi 0, %s174
      %s191 = sphi 0, %s175
      %s199 = sphi 0, %s201
      %s202 = sphi 0, %s199
      %s203 = sphi 0, %s202
      %s219 = sphi 0, %s203
    $region4: #{tpu_custom_call.1} parent=1 // loop_header_branch
      %18 = sbr.rel (%p16) target = $region8
    $region5: #{tpu_custom_call.1} parent=1 // loop_body
      %s20 = ssub.s32 %s15, 1
      %s21 = ssub.s32 %s15, 2
      %s28 = sadd.s32 1, %s23
      %p29 = scmp.ge.s32.totalorder %s28, 1
      %s30 = scalar_select %p29, 0, %s28
      %s31 = sadd.s32 1, %s22
      %s32 = scalar_select %p29, %s31, %s22
      %p33 = scmp.ge.s32.totalorder %s32, 2
      %s34 = scalar_select %p33, 0, %s32
      %s35 = ssub.s32 %s22, %s34
      %s36 = ssub.s32 %s23, %s30
      %s37 = sor.u32 %s35, %s36
      %p38 = scmp.eq.s32.totalorder %s37, 0
      %s40 = sadd.s32 %s39, 1
      %s41 = scalar_select %p38, %s39, %s40
      %p44 = pneg %p38
      %p45 = scmp.eq.s32.totalorder %s15, 1
      %p46 = por %p44, %p45
      %p47 = scmp.ne.s32.totalorder %s39, %s42
      %p48 = scmp.eq.s32.totalorder %s15, 0
      %p49 = por %p47, %p48
      %p50 = scmp.ne.s32.totalorder %s39, %s42
      %p51 = scmp.eq.s32.totalorder %s20, 1
      %p52 = por %p50, %p51
      %p53 = scmp.ne.s32.totalorder %s42, %s43
      %p54 = scmp.eq.s32.totalorder %s20, 0
      %p55 = por %p53, %p54
      %p56 = scmp.ne.s32.totalorder %s42, %s43
      %p57 = scmp.eq.s32.totalorder %s21, 1
      %p58 = por %p56, %p57
      %p60 = scmp.ne.s32.totalorder %s43, %s59
      %p61 = scmp.eq.s32.totalorder %s21, 0
      %p62 = por %p60, %p61
      %s63 = ssub.s32 %s22, %s34
      %p64 = scmp.eq.s32.totalorder %s63, 0
      %s66 = sadd.s32 %s65, 1
      %s67 = scalar_select %p64, %s65, %s66
      %p70 = pneg %p64
      %p71 = scmp.eq.s32.totalorder %s15, 1
      %p72 = por %p70, %p71
      %p73 = scmp.ne.s32.totalorder %s65, %s68
      %p74 = scmp.eq.s32.totalorder %s15, 0
      %p75 = por %p73, %p74
      %p76 = scmp.ne.s32.totalorder %s65, %s68
      %p77 = scmp.eq.s32.totalorder %s20, 1
      %p78 = por %p76, %p77
      %p79 = scmp.ne.s32.totalorder %s68, %s69
      %p80 = scmp.eq.s32.totalorder %s20, 0
      %p81 = por %p79, %p80
      %p82 = scmp.ne.s32.totalorder %s68, %s69
      %p83 = scmp.eq.s32.totalorder %s21, 1
      %p84 = por %p82, %p83
      %p86 = scmp.ne.s32.totalorder %s69, %s85
      %p87 = scmp.eq.s32.totalorder %s21, 0
      %p88 = por %p86, %p87
      %s89 = ssub.s32 %s22, %s34
      %p90 = scmp.eq.s32.totalorder %s89, 0
      %s92 = sadd.s32 %s91, 1
      %s93 = scalar_select %p90, %s91, %s92
      %p96 = pneg %p90
      %p97 = scmp.eq.s32.totalorder %s15, 1
      %p98 = por %p96, %p97
      %p99 = scmp.ne.s32.totalorder %s91, %s94
      %p100 = scmp.eq.s32.totalorder %s15, 0
      %p101 = por %p99, %p100
      %p102 = scmp.ne.s32.totalorder %s91, %s94
      %p103 = scmp.eq.s32.totalorder %s20, 1
      %p104 = por %p102, %p103
      %p105 = scmp.ne.s32.totalorder %s94, %s95
      %p106 = scmp.eq.s32.totalorder %s20, 0
      %p107 = por %p105, %p106
      %p108 = scmp.ne.s32.totalorder %s94, %s95
      %p109 = scmp.eq.s32.totalorder %s21, 1
      %p110 = por %p108, %p109
      %p112 = scmp.ne.s32.totalorder %s95, %s111
      %p113 = scmp.eq.s32.totalorder %s21, 0
      %p114 = por %p112, %p113
      %s115 = ssub.s32 %s23, %s30
      %p116 = scmp.eq.s32.totalorder %s115, 0
      %s118 = sadd.s32 %s117, 1
      %s119 = scalar_select %p116, %s117, %s118
      %p122 = pneg %p116
      %p123 = scmp.eq.s32.totalorder %s15, 1
      %p124 = por %p122, %p123
      %p125 = scmp.ne.s32.totalorder %s117, %s120
      %p126 = scmp.eq.s32.totalorder %s15, 0
      %p127 = por %p125, %p126
      %p128 = scmp.ne.s32.totalorder %s117, %s120
      %p129 = scmp.eq.s32.totalorder %s20, 1
      %p130 = por %p128, %p129
      %p131 = scmp.ne.s32.totalorder %s120, %s121
      %p132 = scmp.eq.s32.totalorder %s20, 0
      %p133 = por %p131, %p132
      %p134 = scmp.ne.s32.totalorder %s120, %s121
      %p135 = scmp.eq.s32.totalorder %s21, 1
      %p136 = por %p134, %p135
      %p138 = scmp.ne.s32.totalorder %s121, %s137
      %p139 = scmp.eq.s32.totalorder %s21, 0
      %p140 = por %p138, %p139
      %s141 = ssub.s32 %s23, %s30
      %p142 = scmp.eq.s32.totalorder %s141, 0
      %s144 = sadd.s32 %s143, 1
      %s145 = scalar_select %p142, %s143, %s144
      %p148 = pneg %p142
      %p149 = scmp.eq.s32.totalorder %s15, 1
      %p150 = por %p148, %p149
      %p151 = scmp.ne.s32.totalorder %s143, %s146
      %p152 = scmp.eq.s32.totalorder %s15, 0
      %p153 = por %p151, %p152
      %p154 = scmp.ne.s32.totalorder %s143, %s146
      %p155 = scmp.eq.s32.totalorder %s20, 1
      %p156 = por %p154, %p155
      %p157 = scmp.ne.s32.totalorder %s146, %s147
      %p158 = scmp.eq.s32.totalorder %s20, 0
      %p159 = por %p157, %p158
      %p160 = scmp.ne.s32.totalorder %s146, %s147
      %p161 = scmp.eq.s32.totalorder %s21, 1
      %p162 = por %p160, %p161
      %p164 = scmp.ne.s32.totalorder %s147, %s163
      %p165 = scmp.eq.s32.totalorder %s21, 0
      %p166 = por %p164, %p165
      %s167 = ssub.s32 %s22, %s34
      %s168 = ssub.s32 %s23, %s30
      %s169 = sor.u32 %s167, %s168
      %p170 = scmp.eq.s32.totalorder %s169, 0
      %s172 = sadd.s32 %s171, 1
      %s173 = scalar_select %p170, %s171, %s172
      %p176 = pneg %p170
      %p177 = scmp.eq.s32.totalorder %s15, 1
      %p178 = por %p176, %p177
      %p179 = scmp.ne.s32.totalorder %s171, %s174
      %p180 = scmp.eq.s32.totalorder %s15, 0
      %p181 = por %p179, %p180
      %p182 = scmp.ne.s32.totalorder %s171, %s174
      %p183 = scmp.eq.s32.totalorder %s20, 1
      %p184 = por %p182, %p183
      %p185 = scmp.ne.s32.totalorder %s174, %s175
      %p186 = scmp.eq.s32.totalorder %s20, 0
      %p187 = por %p185, %p186
      %p188 = scmp.ne.s32.totalorder %s174, %s175
      %p189 = scmp.eq.s32.totalorder %s21, 1
      %p190 = por %p188, %p189
      %p192 = scmp.ne.s32.totalorder %s175, %s191
      %p193 = scmp.eq.s32.totalorder %s21, 0
      %p194 = por %p192, %p193
      %s195 = ssub.s32 %s22, %s34
      %s196 = ssub.s32 %s23, %s30
      %s197 = sor.u32 %s195, %s196
      %p198 = scmp.eq.s32.totalorder %s197, 0
      %s200 = sadd.s32 %s199, 1
      %s201 = scalar_select %p198, %s199, %s200
      %p204 = pneg %p198
      %p205 = scmp.eq.s32.totalorder %s15, 1
      %p206 = por %p204, %p205
      %p207 = scmp.ne.s32.totalorder %s199, %s202
      %p208 = scmp.eq.s32.totalorder %s15, 0
      %p209 = por %p207, %p208
      %p210 = scmp.ne.s32.totalorder %s199, %s202
      %p211 = scmp.eq.s32.totalorder %s20, 1
      %p212 = por %p210, %p211
      %p213 = scmp.ne.s32.totalorder %s202, %s203
      %p214 = scmp.eq.s32.totalorder %s20, 0
      %p215 = por %p213, %p214
      %p216 = scmp.ne.s32.totalorder %s202, %s203
      %p217 = scmp.eq.s32.totalorder %s21, 1
      %p218 = por %p216, %p217
      %p220 = scmp.ne.s32.totalorder %s203, %s219
      %p221 = scmp.eq.s32.totalorder %s21, 0
      %p222 = por %p220, %p221
      %p223 = scmp.le.s32.totalorder 1, %s15
      %p224 = scmp.lt.s32.totalorder %s15, 3
      %p225 = pnand %p223, %p224
      %p226 = pneg %p225
      // Predicated region
      $region9: #{tpu_custom_call.1} parent=5 // pred_check
        _
      $region10: #{tpu_custom_call.1} parent=5 // pred_check_branch
        %228 = sbr.rel (%p225) target = $region12
      $region11: #{tpu_custom_call.1} parent=5 // pred_region
        %s229 = ssub.s32 %s15, 1
        // Predicated region
        $region13: #{tpu_custom_call.1} parent=11 // pred_check
          %p230 = pneg %p133
        $region14: #{tpu_custom_call.1} parent=11 // pred_check_branch
          %232 = sbr.rel (%p230) target = $region16
        $region15: #{tpu_custom_call.1} parent=11 // pred_region
          %s233 = smul.u32 2, %s25
          %p234 = scmp.lt.s32.totalorder %s233, 1
          %s235 = scalar_select %p234, %s233, 1
          %s236 = smul.addr %s235, 8
          %s237 = scalar_lea.vmem %s3, %s236
          %s238 = smul.u32 2, %s25
        $region16: #{tpu_custom_call.1} parent=11 // pred_fallthru
          _
        // Predicated region
        $region17: #{tpu_custom_call.1} parent=11 // pred_check
          %p239 = pneg %p159
        $region18: #{tpu_custom_call.1} parent=11 // pred_check_branch
          %241 = sbr.rel (%p239) target = $region20
        $region19: #{tpu_custom_call.1} parent=11 // pred_region
          %s242 = smul.u32 2, %s25
          %p243 = scmp.lt.s32.totalorder %s242, 1
          %s244 = scalar_select %p243, %s242, 1
          %s245 = smul.addr %s244, 8
          %s246 = scalar_lea.vmem %s4, %s245
          %s247 = smul.u32 2, %s25
        $region20: #{tpu_custom_call.1} parent=11 // pred_fallthru
          _
      $region12: #{tpu_custom_call.1} parent=5 // pred_fallthru
        _
      %p248 = scmp.lt.s32.totalorder %s15, 2
      // Predicated region
      $region21: #{tpu_custom_call.1} parent=5 // pred_check
        %p249 = pneg %p248
      $region22: #{tpu_custom_call.1} parent=5 // pred_check_branch
        %251 = sbr.rel (%p249) target = $region24
      $region23: #{tpu_custom_call.1} parent=5 // pred_region
        // Predicated region
        $region25: #{tpu_custom_call.1} parent=23 // pred_check
          %p252 = pneg %p49
        $region26: #{tpu_custom_call.1} parent=23 // pred_check_branch
          %254 = sbr.rel (%p252) target = $region28
        $region27: #{tpu_custom_call.1} parent=23 // pred_region
          %s255 = smul.u32 2, %s23
          %p256 = scmp.lt.s32.totalorder %s22, 1
          %s257 = scalar_select %p256, %s22, 1
          %p258 = scmp.lt.s32.totalorder %s255, 1
          %s259 = scalar_select %p258, %s255, 1
          %s260 = smul.addr %s257, 2
          %s261 = sadd.s32 %s259, %s260
          %s262 = smul.addr %s261, 8
          %s263 = scalar_lea.vmem %s0, %s262
          %s264 = smul.u32 2, %s23
        $region28: #{tpu_custom_call.1} parent=23 // pred_fallthru
          _
        // Predicated region
        $region29: #{tpu_custom_call.1} parent=23 // pred_check
          %p265 = pneg %p75
        $region30: #{tpu_custom_call.1} parent=23 // pred_check_branch
          %267 = sbr.rel (%p265) target = $region32
        $region31: #{tpu_custom_call.1} parent=23 // pred_region
          %p268 = scmp.lt.s32.totalorder %s22, 1
          %s269 = scalar_select %p268, %s22, 1
          %s270 = smul.addr %s269, 2
          %s271 = smul.addr %s270, 8
          %s272 = scalar_lea.vmem %s1, %s271
        $region32: #{tpu_custom_call.1} parent=23 // pred_fallthru
          _
        // Predicated region
        $region33: #{tpu_custom_call.1} parent=23 // pred_check
          %p273 = pneg %p101
        $region34: #{tpu_custom_call.1} parent=23 // pred_check_branch
          %275 = sbr.rel (%p273) target = $region36
        $region35: #{tpu_custom_call.1} parent=23 // pred_region
          %p276 = scmp.lt.s32.totalorder %s22, 1
          %s277 = scalar_select %p276, %s22, 1
          %s278 = smul.addr %s277, 16
          %s279 = smul.addr %s278, 8
          %s280 = scalar_lea.vmem %s2, %s279
        $region36: #{tpu_custom_call.1} parent=23 // pred_fallthru
          _
        // Predicated region
        $region37: #{tpu_custom_call.1} parent=23 // pred_check
          %p281 = pneg %p181
        $region38: #{tpu_custom_call.1} parent=23 // pred_check_branch
          %283 = sbr.rel (%p281) target = $region40
        $region39: #{tpu_custom_call.1} parent=23 // pred_region
          %s284 = smul.u32 2, %s23
          %p285 = scmp.lt.s32.totalorder %s22, 1
          %s286 = scalar_select %p285, %s22, 1
          %p287 = scmp.lt.s32.totalorder %s284, 1
          %s288 = scalar_select %p287, %s284, 1
          %s289 = smul.addr %s286, 2
          %s290 = sadd.s32 %s288, %s289
          %s291 = smul.addr %s290, 2
          %s292 = scalar_lea.vmem %s5, %s291
          %s293 = smul.u32 2, %s23
        $region40: #{tpu_custom_call.1} parent=23 // pred_fallthru
          _
      $region24: #{tpu_custom_call.1} parent=5 // pred_fallthru
        _
      %p294 = scmp.le.s32.totalorder 1, %s15
      %p295 = scmp.lt.s32.totalorder %s15, 3
      %p296 = pnand %p294, %p295
      %p297 = pneg %p296
      // Predicated region
      $region41: #{tpu_custom_call.1} parent=5 // pred_check
        _
      $region42: #{tpu_custom_call.1} parent=5 // pred_check_branch
        %299 = sbr.rel (%p296) target = $region44
      $region43: #{tpu_custom_call.1} parent=5 // pred_region
        %s300 = ssub.s32 %s15, 1
        %s301 = smul.u32 2, %s25
        %p302 = scmp.lt.s32.totalorder %s24, 1
        %s303 = scalar_select %p302, %s24, 1
        %p304 = scmp.lt.s32.totalorder %s301, 1
        %s305 = scalar_select %p304, %s301, 1
        %s306 = smul.addr %s303, 2
        %s307 = sadd.s32 %s305, %s306
        %s308 = smul.addr %s307, 8
        %s309 = scalar_lea.vmem %s0, %s308
        %p310 = pneg %p55
        %p311 = pneg %p52
        %p312 = scmp.lt.s32.totalorder %s24, 1
        %s313 = scalar_select %p312, %s24, 1
        %s314 = smul.addr %s313, 2
        %s315 = smul.addr %s314, 8
        %s316 = scalar_lea.vmem %s1, %s315
        %p317 = pneg %p81
        %p318 = pneg %p78
        %p319 = scmp.lt.s32.totalorder %s24, 1
        %s320 = scalar_select %p319, %s24, 1
        %s321 = smul.addr %s320, 16
        %s322 = smul.addr %s321, 8
        %s323 = scalar_lea.vmem %s2, %s322
        %p324 = pneg %p107
        %p325 = pneg %p104
        %s326 = smul.u32 2, %s25
        %p327 = scmp.lt.s32.totalorder %s326, 1
        %s328 = scalar_select %p327, %s326, 1
        %s329 = smul.addr %s328, 8
        %s330 = scalar_lea.vmem %s3, %s329
        %p331 = pneg %p133
        %p332 = pneg %p130
        %s333 = smul.u32 2, %s25
        %p334 = scmp.lt.s32.totalorder %s333, 1
        %s335 = scalar_select %p334, %s333, 1
        %s336 = smul.addr %s335, 8
        %s337 = scalar_lea.vmem %s4, %s336
        %p338 = pneg %p159
        %p339 = pneg %p156
        %s340 = smul.u32 2, %s25
        %p341 = scmp.lt.s32.totalorder %s24, 1
        %s342 = scalar_select %p341, %s24, 1
        %p343 = scmp.lt.s32.totalorder %s340, 1
        %s344 = scalar_select %p343, %s340, 1
        %s345 = smul.addr %s342, 2
        %s346 = sadd.s32 %s344, %s345
        %s347 = smul.addr %s346, 2
        %s348 = scalar_lea.vmem %s5, %s347
        %p349 = pneg %p187
        %p350 = pneg %p184
        %p351 = pneg %p215
        %p352 = pneg %p212
        %s353 = sand.u32 %s202, 1
        %s354 = scalar_lea.sflag [#allocation3], %s353
        %s355 = sand.u32 %s202, 1
        %s356 = smul.addr %s355, 16
        %s357 = scalar_lea.vmem [#allocation2], %s356
        %s358 = smul.u32 2, %s25
        %p359 = scmp.lt.s32.totalorder %s24, 1
        %s360 = scalar_select %p359, %s24, 1
        %p361 = scmp.lt.s32.totalorder %s358, 1
        %s362 = scalar_select %p361, %s358, 1
        %s363 = smul.addr %s360, 2
        %s364 = sadd.s32 %s362, %s363
        %s365 = smul.addr %s364, 8
        %s366 = scalar_lea.vmem %s0, %s365
        %s367 = smul.u32 2, %s25
        %p368 = scmp.lt.s32.totalorder %s24, 1
        %s369 = scalar_select %p368, %s24, 1
        %s370 = smul.addr %s369, 2
        %s371 = smul.addr %s370, 8
        %s372 = scalar_lea.vmem %s1, %s371
        %p373 = scmp.lt.s32.totalorder %s24, 1
        %s374 = scalar_select %p373, %s24, 1
        %s375 = smul.addr %s374, 16
        %s376 = smul.addr %s375, 8
        %s377 = scalar_lea.vmem %s2, %s376
        %s378 = smul.u32 2, %s25
        %p379 = scmp.lt.s32.totalorder %s378, 1
        %s380 = scalar_select %p379, %s378, 1
        %s381 = smul.addr %s380, 8
        %s382 = scalar_lea.vmem %s3, %s381
        %s383 = smul.u32 2, %s25
        %s384 = smul.u32 2, %s25
        %p385 = scmp.lt.s32.totalorder %s384, 1
        %s386 = scalar_select %p385, %s384, 1
        %s387 = smul.addr %s386, 8
        %s388 = scalar_lea.vmem %s4, %s387
        %s389 = smul.u32 2, %s25
        %s390 = smul.u32 2, %s25
        %p391 = scmp.lt.s32.totalorder %s24, 1
        %s392 = scalar_select %p391, %s24, 1
        %p393 = scmp.lt.s32.totalorder %s390, 1
        %s394 = scalar_select %p393, %s390, 1
        %s395 = smul.addr %s392, 2
        %s396 = sadd.s32 %s394, %s395
        %s397 = smul.addr %s396, 2
        %s398 = scalar_lea.vmem %s5, %s397
        %s399 = smul.u32 2, %s25
        %s400 = smul.u32 2, %s25
        %v401 = vld [vmem:[%s366] sm:$0xff]
        %v402 = vld [vmem:[%s366 + $0x8] sm:$0xff]
        %v403 = vld [vmem:[%s382] sm:$0xff]
        %v404 = vld [vmem:[%s382 + $0x8] sm:$0xff]
        %v405 = vmul.f32 %v401, %v403
        %v406 = vmul.f32 %v402, %v404
        %407 = vadd.xlane.f32.xlu0 %v405
        %v408 = vpop.xlane.xlu0 %407
        %409 = vadd.xlane.f32.xlu0 %v406
        %v410 = vpop.xlane.xlu0 %409
        %v411 = vld [vmem:[%s388] sm:$0xff]
        %v412 = vld [vmem:[%s388 + $0x8] sm:$0xff]
        %v413 = vld [vmem:[%s377] sm:$0xff]
        %v414 = vld [vmem:[%s377 + $0x8] sm:$0xff]
        %v415 = vld [vmem:[%s377 + $0x10] sm:$0xff]
        %v416 = vld [vmem:[%s377 + $0x18] sm:$0xff]
        %v417 = vld [vmem:[%s377 + $0x20] sm:$0xff]
        %v418 = vld [vmem:[%s377 + $0x28] sm:$0xff]
        %v419 = vld [vmem:[%s377 + $0x30] sm:$0xff]
        %v420 = vld [vmem:[%s377 + $0x38] sm:$0xff]
        %v421 = vld [vmem:[%s377 + $0x40] sm:$0xff]
        %v422 = vld [vmem:[%s377 + $0x48] sm:$0xff]
        %v423 = vld [vmem:[%s377 + $0x50] sm:$0xff]
        %v424 = vld [vmem:[%s377 + $0x58] sm:$0xff]
        %v425 = vld [vmem:[%s377 + $0x60] sm:$0xff]
        %v426 = vld [vmem:[%s377 + $0x68] sm:$0xff]
        %v427 = vld [vmem:[%s377 + $0x70] sm:$0xff]
        %v428 = vld [vmem:[%s377 + $0x78] sm:$0xff]
        %429 = vmatpush.msra.mxu0 %v428
        %430 = vmatpush.msra.mxu0 %v427
        %431 = vmatpush.msra.mxu0 %v426
        %432 = vmatpush.msra.mxu0 %v425
        %433 = vmatpush.msra.mxu0 %v424
        %434 = vmatpush.msra.mxu0 %v423
        %435 = vmatpush.msra.mxu0 %v422
        %436 = vmatpush.msra.mxu0 %v421
        %437 = vmatpush.msra.mxu0 %v420
        %438 = vmatpush.msra.mxu0 %v419
        %439 = vmatpush.msra.mxu0 %v418
        %440 = vmatpush.msra.mxu0 %v417
        %441 = vmatpush.msra.mxu0 %v416
        %442 = vmatpush.msra.mxu0 %v415
        %443 = vmatpush.msra.mxu0 %v414
        %444 = vmatpush.msra.mxu0 %v413
        %445 = vmatmul.f32.gmra.mxu0 %v411
        %v446 = vpop.f32.mrf.mxu0
        %v447 = vadd.f32 0.0, %v446
        %448 = vmatmul.f32.gmra.mxu0 %v412
        %v449 = vpop.f32.mrf.mxu0
        %v450 = vadd.f32 0.0, %v449
        %451 = vdwg.mxu0
        %v452 = vadd.f32 %v408, %v447
        %v453 = vadd.f32 %v410, %v450
        %vm454 = vcmp.gt.f32.partialorder %v452, 0.0
        %vm455 = vcmp.gt.f32.partialorder %v453, 0.0
        %v456 = vmul.f32 %v452, 0.2
        %v457 = vmul.f32 %v453, 0.2
        %v458 = vsel %vm454, %v452, %v456
        %v459 = vsel %vm455, %v453, %v457
        %v460 = vld [vmem:[%s398] sm:$0x3]
        %v461 = vld [vmem:[%s398 + $0x2] sm:$0x3]
        %v462 = vunpack.c.0.s8 %v460
        %v463 = vunpack.c.0.s8 %v461
        %v464 = vcvt.s32.f32 %v462
        %v465 = vcvt.s32.f32 %v463
        %vm466 = vcmp.gt.f32.partialorder %v464, 0.0
        %vm467 = vcmp.gt.f32.partialorder %v465, 0.0
        %v468 = vsel %vm466, %v458, -1e+30
        %v469 = vsel %vm467, %v459, -1e+30
        %vm470 = vcmask 130048
        %v471 = vsel %vm470, %v468, -inf
        %472 = vmax.xlane.f32.xlu0 %v471
        %v473 = vpop.xlane.xlu0 %472
        %v474 = vsel %vm470, %v469, -inf
        %475 = vmax.xlane.f32.xlu0 %v474
        %v476 = vpop.xlane.xlu0 %475
        %v477 = vsub.f32 %v468, %v473
        %v478 = vsub.f32 %v469, %v476
        %v479 = vmul.f32 %v477, 1.442695
        %v480 = vpow.pop %v479
        %v481 = vmul.f32 %v478, 1.442695
        %v482 = vpow.pop %v481
        %v483 = vsel %vm470, %v480, 0.0
        %484 = vadd.xlane.f32.xlu0 %v483
        %v485 = vpop.xlane.xlu0 %484
        %v486 = vsel %vm470, %v482, 0.0
        %487 = vadd.xlane.f32.xlu0 %v486
        %v488 = vpop.xlane.xlu0 %487
        %v489 = vld [vmem:[%s372] sm:$0xff]
        %v490 = vld [vmem:[%s372 + $0x8] sm:$0xff]
        %v492 = vsel %vm470, %v480, 0
        %v495 = vsel %vm470, %v482, 0
        %497 = vmatpush.msra.mxu0 0.0
        %498 = vmatpush.msra.mxu0 0.0
        %499 = vmatpush.msra.mxu0 0.0
        %500 = vmatpush.msra.mxu0 0.0
        %501 = vmatpush.msra.mxu0 0.0
        %502 = vmatpush.msra.mxu0 0.0
        %503 = vmatpush.msra.mxu0 0.0
        %504 = vmatpush.msra.mxu0 0.0
        %505 = vmatpush.msra.mxu0 0.0
        %506 = vmatpush.msra.mxu0 0.0
        %507 = vmatpush.msra.mxu0 0.0
        %508 = vmatpush.msra.mxu0 0.0
        %509 = vmatpush.msra.mxu0 0.0
        %510 = vmatpush.msra.mxu0 0.0
        %511 = vmatpush.msra.mxu0 %v490
        %512 = vmatpush.msra.mxu0 %v489
        %513 = vmatmul.f32.gmra.mxu0 %v492
        %v514 = vpop.f32.mrf.mxu0
        %v515 = vadd.f32 0.0, %v514
        %516 = vmatmul.f32.gmra.mxu0 %v495
        %v517 = vpop.f32.mrf.mxu0
        %v518 = vadd.f32 0.0, %v517
        %519 = vdwg.mxu0
        %v520 = vrcp.pop %v485
        %v521 = vmul.f32 %v485, %v520
        %v522 = vsub.f32 1.0, %v521
        %v523 = vmul.f32 %v520, %v522
        %v524 = vadd.f32 %v520, %v523
        %vm525 = vweird.f32 %v485
        %vm526 = vweird.f32 %v520
        %vm527 = vmor %vm525, %vm526
        %v528 = vsel %vm527, %v520, %v524
        %v529 = vand.u32 2147483647, %v485
        %vm530 = vcmp.eq.f32.partialorder %v529, 8.507059e+37
        %v531 = vand.u32 %v485, 2147483648
        %v532 = vor.u32 1.1754944e-38, %v531
        %v533 = vsel %vm530, %v532, %v528
        %v534 = vrcp.pop %v488
        %v535 = vmul.f32 %v488, %v534
        %v536 = vsub.f32 1.0, %v535
        %v537 = vmul.f32 %v534, %v536
        %v538 = vadd.f32 %v534, %v537
        %vm539 = vweird.f32 %v488
        %vm540 = vweird.f32 %v534
        %vm541 = vmor %vm539, %vm540
        %v542 = vsel %vm541, %v534, %v538
        %v543 = vand.u32 2147483647, %v488
        %vm544 = vcmp.eq.f32.partialorder %v543, 8.507059e+37
        %v545 = vand.u32 %v488, 2147483648
        %v546 = vor.u32 1.1754944e-38, %v545
        %v547 = vsel %vm544, %v546, %v542
        %v548 = vmul.f32 %v515, %v533
        %v549 = vmul.f32 %v518, %v547
        %v550 = vmul.f32 %v401, 0.3
        %v551 = vmul.f32 %v402, 0.3
        %v552 = vadd.f32 %v548, %v550
        %v553 = vadd.f32 %v549, %v551
        %vm554 = vcmp.gt.f32.partialorder %v552, 0.0
        %vm555 = vcmp.gt.f32.partialorder %v553, 0.0
        %v556 = vmin.f32 %v552, 0.0
        %v557 = vmin.f32 %v553, 0.0
        %v558 = vmul.f32 %v556, 1.442695
        %v559 = vpow.pop %v558
        %v560 = vmul.f32 %v557, 1.442695
        %v561 = vpow.pop %v560
        %v562 = vsub.f32 %v559, 1.0
        %v563 = vsub.f32 %v561, 1.0
        %v564 = vsel %vm554, %v552, %v562
        %v565 = vsel %vm555, %v553, %v563
        %566 = vst [vmem:[%s357] sm:$0xff] %v564
        %567 = vst [vmem:[%s357 + $0x8] sm:$0xff] %v565
        %s568 = sand.u32 %s202, 1
        %s569 = scalar_lea.sflag [#allocation3], %s568
        %s570 = sand.u32 %s202, 1
        %s571 = smul.addr %s570, 16
        %s572 = scalar_lea.vmem [#allocation2], %s571
        // Predicated region
        $region45: #{tpu_custom_call.1} parent=43 // pred_check
          %p573 = pneg %p212
        $region46: #{tpu_custom_call.1} parent=43 // pred_check_branch
          %575 = sbr.rel (%p573) target = $region48
        $region47: #{tpu_custom_call.1} parent=43 // pred_region
          %s576 = smul.u32 2, %s25
          %578 = vsyncadd %s569, 0
          %s579 = smul.addr %s24, 2
          %s580 = sadd.s32 %s576, %s579
          %s581 = smul.addr %s580, 8
          %s582 = scalar_lea.hbm %s6, %s581
          %s583 = sshll.u32 %s572, 4
          %s584 = int_to_ptr.vmem [resolvable:$true] %s583
          %s585 = sshll.u32 %s582, 4
          %s586 = int_to_ptr.hbm [resolvable:$true] %s585
          %591 = dma.vmem_to_hbm [thread:$0]  %s584, 256, %s586, %s569, 128, 128, 8
        $region48: #{tpu_custom_call.1} parent=43 // pred_fallthru
          _
      $region44: #{tpu_custom_call.1} parent=5 // pred_fallthru
        _
      %p592 = scmp.le.s32.totalorder 2, %s15
      // Predicated region
      $region49: #{tpu_custom_call.1} parent=5 // pred_check
        %p593 = pneg %p592
      $region50: #{tpu_custom_call.1} parent=5 // pred_check_branch
        %595 = sbr.rel (%p593) target = $region52
      $region51: #{tpu_custom_call.1} parent=5 // pred_region
        %s596 = ssub.s32 %s15, 2
        // Predicated region
        $region53: #{tpu_custom_call.1} parent=51 // pred_check
          %p597 = pneg %p218
        $region54: #{tpu_custom_call.1} parent=51 // pred_check_branch
          %599 = sbr.rel (%p597) target = $region56
        $region55: #{tpu_custom_call.1} parent=51 // pred_region
          %s600 = sand.u32 %s203, 1
          %s601 = scalar_lea.sflag [#allocation3], %s600
          %s602 = sand.u32 %s203, 1
          %s603 = smul.addr %s602, 16
          %s604 = scalar_lea.vmem [#allocation2], %s603
          %606 = dma.done %s601, 256
        $region56: #{tpu_custom_call.1} parent=51 // pred_fallthru
          _
      $region52: #{tpu_custom_call.1} parent=5 // pred_fallthru
        _
    $region6: #{tpu_custom_call.1} parent=1 // loop_footer
      %s19 = sadd.s32 1, %s15
    $region7: #{tpu_custom_call.1} parent=1 // loop_footer_branch
      %14 = sbr.rel target = $region3
    $region8: #{tpu_custom_call.1} parent=1 // loop_exit
      _
    %607 = vsyncpa [#allocation3], 1
    %s608 = scalar_lea.sflag [#allocation3], 1
    %609 = vsyncpa %s608, 1

</llo_original>
